<compile_context>
chip_gen: v6e
topology: v6e:2x2x1
jax: 0.10.0
libtpu: 0.0.40
codegen_flags: <defaults>
</compile_context>

<pallas_src>
import functools

import jax
import jax.numpy as jnp
from jax.experimental import pallas as pl
from jax.experimental.pallas import tpu as pltpu


# ---------------------------------------------------------------------------
# Kernel
# ---------------------------------------------------------------------------
def _ncdm_kernel(stu_ref, kdiff_ref, edisc_ref, kn_ref,
                 w1_ref, b1_ref, w2_ref, b2_ref, w3_ref, b3_ref,
                 out_ref):
    # sigmoid on the gathered embeddings (EUP)
    stu = jax.nn.sigmoid(stu_ref[...])          # (TB, Kp)
    kd = jax.nn.sigmoid(kdiff_ref[...])         # (TB, Kp)
    ed = jax.nn.sigmoid(edisc_ref[...])         # (TB, 1)

    # input_x = e_disc * (stu_emb - k_diff) * kn_emb   (VPU, broadcast on lanes)
    x = ed * (stu - kd) * kn_ref[...]           # (TB, Kp)

    # PosLinear layers: weights are already |W| and transposed to (in, out).
    h1 = jax.nn.sigmoid(
        jnp.dot(x, w1_ref[...], preferred_element_type=jnp.float32) + b1_ref[...])
    h2 = jax.nn.sigmoid(
        jnp.dot(h1, w2_ref[...], preferred_element_type=jnp.float32) + b2_ref[...])

    # Final layer computed as (1, H2p) x (TB, H2p)^T -> (1, TB):
    # batch lands on the lane axis -> lane-dense, unmasked output stores.
    z = jax.lax.dot_general(
        w3_ref[...], h2, (((1,), (1,)), ((), ())),
        preferred_element_type=jnp.float32)                  # (1, TB)
    out_ref[...] = jax.nn.sigmoid(z + b3_ref[...])           # (1, TB)


# ---------------------------------------------------------------------------
# Wrapper
# ---------------------------------------------------------------------------
def _round_up(x, m):
    return ((x + m - 1) // m) * m


def _pad2(a, rows, cols):
    r, c = a.shape
    return jnp.pad(a, ((0, rows - r), (0, cols - c)))


def _prep_weights(params, k_pad, h1_pad, h2_pad):
    # PosLinear weight: 2*relu(-W) + W == |W|.  Store transposed (in, out), zero-padded.
    w1p = _pad2(jnp.abs(params["w1"]).T, k_pad, h1_pad)      # (Kp,  H1p)
    w2p = _pad2(jnp.abs(params["w2"]).T, h1_pad, h2_pad)     # (H1p, H2p)
    w3p = _pad2(jnp.abs(params["w3"]), 1, h2_pad)            # (1,   H2p)  (row, in-dim last)
    b1p = _pad2(params["b1"], 1, h1_pad)                     # (1, H1p)
    b2p = _pad2(params["b2"], 1, h2_pad)                     # (1, H2p)
    b3p = params["b3"]                                       # (1, 1)
    return w1p, b1p, w2p, b2p, w3p, b3p


@functools.partial(jax.jit, static_argnames=("tb",))
def ncdm_forward(params, stu_id, exer_id, kn_emb, *, tb=256):
    # --- glue: embedding gathers (plain JAX indexing, fused by XLA under jit) ---
    stu_e = params["stu_emb"][stu_id].astype(jnp.float32)    # (B, K)
    k_d = params["k_diff"][exer_id].astype(jnp.float32)      # (B, K)
    e_d = params["e_disc"][exer_id].astype(jnp.float32)      # (B, 1)
    kn_emb = kn_emb.astype(jnp.float32)

    B, K = stu_e.shape
    H1 = params["w1"].shape[0]
    H2 = params["w2"].shape[0]

    # lane-dense padding of feature dims; batch tile size is a multiple of 128
    k_pad = _round_up(K, 128)
    h1_pad = _round_up(H1, 128)
    h2_pad = _round_up(H2, 128)
    TB = min(tb, _round_up(B, 128))
    b_pad = _round_up(B, TB)
    grid = (b_pad // TB,)

    w1p, b1p, w2p, b2p, w3p, b3p = _prep_weights(params, k_pad, h1_pad, h2_pad)

    stu_p = _pad2(stu_e, b_pad, k_pad)
    kd_p = _pad2(k_d, b_pad, k_pad)
    ed_p = _pad2(e_d, b_pad, 1)
    kn_p = _pad2(kn_emb, b_pad, k_pad)

    data_spec = pl.BlockSpec((TB, k_pad), lambda i: (i, 0))
    disc_spec = pl.BlockSpec((TB, 1), lambda i: (i, 0))

    def const_spec(arr):
        # constant block index across the grid -> fetched once, VMEM-resident
        return pl.BlockSpec(arr.shape, lambda i: (0, 0))

    out = pl.pallas_call(
        _ncdm_kernel,
        out_shape=jax.ShapeDtypeStruct((1, b_pad), jnp.float32),
        grid=grid,
        in_specs=[
            data_spec, data_spec, disc_spec, data_spec,
            const_spec(w1p), const_spec(b1p),
            const_spec(w2p), const_spec(b2p),
            const_spec(w3p), const_spec(b3p),
        ],
        out_specs=pl.BlockSpec((1, TB), lambda i: (0, i)),
        compiler_params=pltpu.CompilerParams(
            dimension_semantics=("parallel",)),
    )(stu_p, kd_p, ed_p, kn_p, w1p, b1p, w2p, b2p, w3p, b3p)

    # drop padded rows; equivalent of output.view(-1)
    return out[0, :B]


# ---------------------------------------------------------------------------
# Params + pure-JAX reference (for correctness check)
# ---------------------------------------------------------------------------
def init_params(key, student_num, exercise_num, knowledge_num, hid1, hid2):
    def xavier_normal(k, shape):
        fan_out, fan_in = shape
        std = (2.0 / (fan_in + fan_out)) ** 0.5
        return std * jax.random.normal(k, shape, dtype=jnp.float32)

    ks = jax.random.split(key, 8)
    return {
        "stu_emb": xavier_normal(ks[0], (student_num, knowledge_num)),
        "k_diff":  xavier_normal(ks[1], (exercise_num, knowledge_num)),
        "e_disc":  xavier_normal(ks[2], (exercise_num, 1)),
        # PyTorch Linear stores weight as (out_features, in_features)
        "w1": xavier_normal(ks[3], (hid1, knowledge_num)),
        "b1": jnp.zeros((1, hid1), jnp.float32),
        "w2": xavier_normal(ks[4], (hid2, hid1)),
        "b2": jnp.zeros((1, hid2), jnp.float32),
        "w3": xavier_normal(ks[5], (1, hid2)),
        "b3": jnp.zeros((1, 1), jnp.float32),
    }


def _ref_forward(params, stu_id, exer_id, kn_emb):
    stu = jax.nn.sigmoid(params["stu_emb"][stu_id])
    kd = jax.nn.sigmoid(params["k_diff"][exer_id])
    ed = jax.nn.sigmoid(params["e_disc"][exer_id])
    x = ed * (stu - kd) * kn_emb

    def pos_linear(v, w, b):
        return v @ jnp.abs(w).T + b

    h1 = jax.nn.sigmoid(pos_linear(x, params["w1"], params["b1"]))
    h2 = jax.nn.sigmoid(pos_linear(h1, params["w2"], params["b2"]))
    return jax.nn.sigmoid(pos_linear(h2, params["w3"], params["b3"])).reshape(-1)


# ---------------------------------------------------------------------------
# Demo
# ---------------------------------------------------------------------------
if __name__ == "__main__":
    # small, NCDM-consistent shapes
    student_num, exercise_num, knowledge_num = 16, 20, 32
    hid1, hid2 = 64, 32
    batch = 8

    key = jax.random.PRNGKey(0)
    pkey, k1, k2, k3 = jax.random.split(key, 4)

    params = init_params(pkey, student_num, exercise_num, knowledge_num, hid1, hid2)

    stu_id = jax.random.randint(k1, (batch,), 0, student_num)
    exer_id = jax.random.randint(k2, (batch,), 0, exercise_num)
    # knowledge-concept (multi-hot) embedding for each exercise in the batch
    kn_emb = (jax.random.uniform(k3, (batch, knowledge_num)) < 0.3).astype(jnp.float32)

    out = ncdm_forward(params, stu_id, exer_id, kn_emb)
    jax.block_until_ready(out)

    assert out.shape == (batch,)
    assert bool(jnp.all((out >= 0.0) & (out <= 1.0)))

    ref = _ref_forward(params, stu_id, exer_id, kn_emb)
    assert bool(jnp.allclose(out, ref, atol=1e-5, rtol=1e-5)), (out, ref)

    print("KERNEL_OK")
</pallas_src>

<mosaic_0001>
module attributes {stable_mosaic.version = 11 : i64} {
  func.func @_ncdm_kernel(%arg0: i32, %arg1: memref<128x128xf32, #tpu.memory_space<vmem>>, %arg2: memref<128x128xf32, #tpu.memory_space<vmem>>, %arg3: memref<128x1xf32, #tpu.memory_space<vmem>>, %arg4: memref<128x128xf32, #tpu.memory_space<vmem>>, %arg5: memref<128x128xf32, #tpu.memory_space<vmem>>, %arg6: memref<1x128xf32, #tpu.memory_space<vmem>>, %arg7: memref<128x128xf32, #tpu.memory_space<vmem>>, %arg8: memref<1x128xf32, #tpu.memory_space<vmem>>, %arg9: memref<1x128xf32, #tpu.memory_space<vmem>>, %arg10: memref<1x1xf32, #tpu.memory_space<vmem>>, %arg11: memref<1x128xf32, #tpu.memory_space<vmem>>) attributes {dimension_semantics = [#tpu.dimension_semantics<parallel>], iteration_bounds = array<i64: 1>, scalar_prefetch = 0 : i64, scratch_operands = 0 : i64, tpu.core_type = #tpu.core_type<tc>, window_params = [{transform_indices = @transform_0, window_bounds = array<i64: 128, 128>}, {transform_indices = @transform_1, window_bounds = array<i64: 128, 128>}, {transform_indices = @transform_2, window_bounds = array<i64: 128, 1>}, {transform_indices = @transform_3, window_bounds = array<i64: 128, 128>}, {pipeline_mode = #tpu.pipeline_mode<synchronous>, transform_indices = @transform_4, window_bounds = array<i64: 128, 128>}, {pipeline_mode = #tpu.pipeline_mode<synchronous>, transform_indices = @transform_5, window_bounds = array<i64: 1, 128>}, {pipeline_mode = #tpu.pipeline_mode<synchronous>, transform_indices = @transform_6, window_bounds = array<i64: 128, 128>}, {pipeline_mode = #tpu.pipeline_mode<synchronous>, transform_indices = @transform_7, window_bounds = array<i64: 1, 128>}, {pipeline_mode = #tpu.pipeline_mode<synchronous>, transform_indices = @transform_8, window_bounds = array<i64: 1, 128>}, {pipeline_mode = #tpu.pipeline_mode<synchronous>, transform_indices = @transform_9, window_bounds = array<i64: 1, 1>}, {transform_indices = @transform_10, window_bounds = array<i64: 1, 128>}]} {
    %c0 = arith.constant 0 : index
    %c0_0 = arith.constant 0 : index
    %0 = vector.load %arg1[%c0, %c0_0] : memref<128x128xf32, #tpu.memory_space<vmem>>, vector<128x128xf32>
    %1 = arith.negf %0 : vector<128x128xf32>
    %2 = math.exp %1 : vector<128x128xf32>
    %cst = arith.constant 1.000000e+00 : f32
    %3 = vector.broadcast %cst : f32 to vector<128x128xf32>
    %4 = arith.addf %3, %2 : vector<128x128xf32>
    %5 = arith.divf %3, %4 : vector<128x128xf32>
    %c0_1 = arith.constant 0 : index
    %c0_2 = arith.constant 0 : index
    %6 = vector.load %arg2[%c0_1, %c0_2] : memref<128x128xf32, #tpu.memory_space<vmem>>, vector<128x128xf32>
    %7 = arith.negf %6 : vector<128x128xf32>
    %8 = math.exp %7 : vector<128x128xf32>
    %cst_3 = arith.constant 1.000000e+00 : f32
    %9 = vector.broadcast %cst_3 : f32 to vector<128x128xf32>
    %10 = arith.addf %9, %8 : vector<128x128xf32>
    %11 = arith.divf %9, %10 : vector<128x128xf32>
    %c0_4 = arith.constant 0 : index
    %c0_5 = arith.constant 0 : index
    %12 = vector.load %arg3[%c0_4, %c0_5] : memref<128x1xf32, #tpu.memory_space<vmem>>, vector<128x1xf32>
    %13 = arith.negf %12 : vector<128x1xf32>
    %14 = math.exp %13 : vector<128x1xf32>
    %cst_6 = arith.constant 1.000000e+00 : f32
    %15 = vector.broadcast %cst_6 : f32 to vector<128x1xf32>
    %16 = arith.addf %15, %14 : vector<128x1xf32>
    %17 = arith.divf %15, %16 : vector<128x1xf32>
    %18 = arith.subf %5, %11 : vector<128x128xf32>
    %19 = vector.broadcast %17 : vector<128x1xf32> to vector<128x128xf32>
    %20 = arith.mulf %19, %18 : vector<128x128xf32>
    %c0_7 = arith.constant 0 : index
    %c0_8 = arith.constant 0 : index
    %21 = vector.load %arg4[%c0_7, %c0_8] : memref<128x128xf32, #tpu.memory_space<vmem>>, vector<128x128xf32>
    %22 = arith.mulf %20, %21 : vector<128x128xf32>
    %c0_9 = arith.constant 0 : index
    %c0_10 = arith.constant 0 : index
    %23 = vector.load %arg5[%c0_9, %c0_10] : memref<128x128xf32, #tpu.memory_space<vmem>>, vector<128x128xf32>
    %cst_11 = arith.constant dense<0.000000e+00> : vector<128x128xf32>
    %24 = tpu.matmul %22, %23, %cst_11 {dimension_numbers = #tpu.dot_dimension_numbers<[1], [0], [0], [1], [0, 0, 1, 1], [], []>} : vector<128x128xf32>, vector<128x128xf32>, vector<128x128xf32> -> vector<128x128xf32>
    %c0_12 = arith.constant 0 : index
    %c0_13 = arith.constant 0 : index
    %25 = vector.load %arg6[%c0_12, %c0_13] : memref<1x128xf32, #tpu.memory_space<vmem>>, vector<1x128xf32>
    %26 = vector.broadcast %25 : vector<1x128xf32> to vector<128x128xf32>
    %27 = arith.addf %24, %26 : vector<128x128xf32>
    %28 = arith.negf %27 : vector<128x128xf32>
    %29 = math.exp %28 : vector<128x128xf32>
    %cst_14 = arith.constant 1.000000e+00 : f32
    %30 = vector.broadcast %cst_14 : f32 to vector<128x128xf32>
    %31 = arith.addf %30, %29 : vector<128x128xf32>
    %32 = arith.divf %30, %31 : vector<128x128xf32>
    %c0_15 = arith.constant 0 : index
    %c0_16 = arith.constant 0 : index
    %33 = vector.load %arg7[%c0_15, %c0_16] : memref<128x128xf32, #tpu.memory_space<vmem>>, vector<128x128xf32>
    %cst_17 = arith.constant dense<0.000000e+00> : vector<128x128xf32>
    %34 = tpu.matmul %32, %33, %cst_17 {dimension_numbers = #tpu.dot_dimension_numbers<[1], [0], [0], [1], [0, 0, 1, 1], [], []>} : vector<128x128xf32>, vector<128x128xf32>, vector<128x128xf32> -> vector<128x128xf32>
    %c0_18 = arith.constant 0 : index
    %c0_19 = arith.constant 0 : index
    %35 = vector.load %arg8[%c0_18, %c0_19] : memref<1x128xf32, #tpu.memory_space<vmem>>, vector<1x128xf32>
    %36 = vector.broadcast %35 : vector<1x128xf32> to vector<128x128xf32>
    %37 = arith.addf %34, %36 : vector<128x128xf32>
    %38 = arith.negf %37 : vector<128x128xf32>
    %39 = math.exp %38 : vector<128x128xf32>
    %cst_20 = arith.constant 1.000000e+00 : f32
    %40 = vector.broadcast %cst_20 : f32 to vector<128x128xf32>
    %41 = arith.addf %40, %39 : vector<128x128xf32>
    %42 = arith.divf %40, %41 : vector<128x128xf32>
    %c0_21 = arith.constant 0 : index
    %c0_22 = arith.constant 0 : index
    %43 = vector.load %arg9[%c0_21, %c0_22] : memref<1x128xf32, #tpu.memory_space<vmem>>, vector<1x128xf32>
    %cst_23 = arith.constant dense<0.000000e+00> : vector<1x128xf32>
    %44 = tpu.matmul %43, %42, %cst_23 {dimension_numbers = #tpu.dot_dimension_numbers<[1], [1], [0], [0], [0, 0, 1, 0], [], []>} : vector<1x128xf32>, vector<128x128xf32>, vector<1x128xf32> -> vector<1x128xf32>
    %c0_24 = arith.constant 0 : index
    %c0_25 = arith.constant 0 : index
    %45 = vector.load %arg10[%c0_24, %c0_25] : memref<1x1xf32, #tpu.memory_space<vmem>>, vector<1x1xf32>
    %46 = vector.broadcast %45 : vector<1x1xf32> to vector<1x128xf32>
    %47 = arith.addf %44, %46 : vector<1x128xf32>
    %48 = arith.negf %47 : vector<1x128xf32>
    %49 = math.exp %48 : vector<1x128xf32>
    %cst_26 = arith.constant 1.000000e+00 : f32
    %50 = vector.broadcast %cst_26 : f32 to vector<1x128xf32>
    %51 = arith.addf %50, %49 : vector<1x128xf32>
    %52 = arith.divf %50, %51 : vector<1x128xf32>
    %c0_27 = arith.constant 0 : index
    %c0_28 = arith.constant 0 : index
    %53 = vector.load %arg11[%c0_27, %c0_28] : memref<1x128xf32, #tpu.memory_space<vmem>>, vector<1x128xf32>
    tpu.vector_store %arg11[%c0_27, %c0_28], %52 {strides = array<i32>} : memref<1x128xf32, #tpu.memory_space<vmem>>, vector<1x128xf32>,
    return
  }
  func.func @transform_0(%arg0: i32) -> (i32, i32) {
    %c0_i32 = arith.constant 0 : i32
    %c0_i32_0 = arith.constant 0 : i32
    return %arg0, %c0_i32 : i32, i32
  }
  func.func @transform_1(%arg0: i32) -> (i32, i32) {
    %c0_i32 = arith.constant 0 : i32
    %c0_i32_0 = arith.constant 0 : i32
    return %arg0, %c0_i32 : i32, i32
  }
  func.func @transform_2(%arg0: i32) -> (i32, i32) {
    %c0_i32 = arith.constant 0 : i32
    %c0_i32_0 = arith.constant 0 : i32
    return %arg0, %c0_i32 : i32, i32
  }
  func.func @transform_3(%arg0: i32) -> (i32, i32) {
    %c0_i32 = arith.constant 0 : i32
    %c0_i32_0 = arith.constant 0 : i32
    return %arg0, %c0_i32 : i32, i32
  }
  func.func @transform_4(%arg0: i32) -> (i32, i32) {
    %c0_i32 = arith.constant 0 : i32
    %c0_i32_0 = arith.constant 0 : i32
    %c0_i32_1 = arith.constant 0 : i32
    return %c0_i32, %c0_i32_0 : i32, i32
  }
  func.func @transform_5(%arg0: i32) -> (i32, i32) {
    %c0_i32 = arith.constant 0 : i32
    %c0_i32_0 = arith.constant 0 : i32
    %c0_i32_1 = arith.constant 0 : i32
    return %c0_i32, %c0_i32_0 : i32, i32
  }
  func.func @transform_6(%arg0: i32) -> (i32, i32) {
    %c0_i32 = arith.constant 0 : i32
    %c0_i32_0 = arith.constant 0 : i32
    %c0_i32_1 = arith.constant 0 : i32
    return %c0_i32, %c0_i32_0 : i32, i32
  }
  func.func @transform_7(%arg0: i32) -> (i32, i32) {
    %c0_i32 = arith.constant 0 : i32
    %c0_i32_0 = arith.constant 0 : i32
    %c0_i32_1 = arith.constant 0 : i32
    return %c0_i32, %c0_i32_0 : i32, i32
  }
  func.func @transform_8(%arg0: i32) -> (i32, i32) {
    %c0_i32 = arith.constant 0 : i32
    %c0_i32_0 = arith.constant 0 : i32
    %c0_i32_1 = arith.constant 0 : i32
    return %c0_i32, %c0_i32_0 : i32, i32
  }
  func.func @transform_9(%arg0: i32) -> (i32, i32) {
    %c0_i32 = arith.constant 0 : i32
    %c0_i32_0 = arith.constant 0 : i32
    %c0_i32_1 = arith.constant 0 : i32
    return %c0_i32, %c0_i32_0 : i32, i32
  }
  func.func @transform_10(%arg0: i32) -> (i32, i32) {
    %c0_i32 = arith.constant 0 : i32
    %c0_i32_0 = arith.constant 0 : i32
    return %c0_i32, %arg0 : i32, i32
  }
}

</mosaic_0001>

<llo_original>
// kernel: ncdm_forward.1
$region0: #{ncdm_forward.1}
  #allocation0 [shape = 'u32[]', space=smem, size = 0x4, offset = 0x4, fixed_abs, tag = 'smem constant byte address 0x4 - core index']
  #allocation1 [shape = 'u32[144,128]{1,0:T(1,128)}', space=vmem, size = 0x12000, scoped, tag = 'internal scratch']
  #allocation2 [shape = 'f32[1,1]{1,0:T(1,128)S(1)}', space=vmem, size = 0x200, scoped, tag = 'scoped memory for ncdm_forward.1']
  %s0 = inlined_call_operand.vmem [shape: f32[128,128], index: 0, kind: input, shape index: {}]
  %s1 = inlined_call_operand.vmem [shape: f32[128,128], index: 1, kind: input, shape index: {}]
  %s2 = inlined_call_operand.vmem [shape: f32[128,1], index: 2, kind: input, shape index: {}]
  %s3 = inlined_call_operand.vmem [shape: f32[128,128], index: 3, kind: input, shape index: {}]
  %s4 = inlined_call_operand.vmem [shape: f32[128,128], index: 4, kind: input, shape index: {}]
  %s5 = inlined_call_operand.vmem [shape: f32[1,128], index: 5, kind: input, shape index: {}]
  %s6 = inlined_call_operand.vmem [shape: f32[128,128], index: 6, kind: input, shape index: {}]
  %s7 = inlined_call_operand.vmem [shape: f32[1,128], index: 7, kind: input, shape index: {}]
  %s8 = inlined_call_operand.vmem [shape: f32[1,128], index: 8, kind: input, shape index: {}]
  %s9 = inlined_call_operand.<no memory space> [shape: f32[1,1], index: 9, kind: input, shape index: {}]
  %s10 = inlined_call_operand.vmem [shape: f32[1,128], index: 10, kind: output, shape index: {}]
  %s11 = sld [smem:[#allocation0]]
  $region50: #{ncdm_forward.1} parent=0
    _
  %s13 = ssub.s32 1, %s11
  %s14 = scalar_select 0, %s13, %s11
  %v15 = vstv %s9
  %16 = vst [vmem:[#allocation2] sm:$0x1] %v15
  // Predicated region
  $region2: #{ncdm_forward.1} parent=0 // pred_check
    _
  $region3: #{ncdm_forward.1} parent=0 // pred_check_branch
    %18 = sbr.rel (0) target = $region5
  $region4: #{ncdm_forward.1} parent=0 // pred_region
    _
  $region5: #{ncdm_forward.1} parent=0 // pred_fallthru
    _
  // Predicated region
  $region6: #{ncdm_forward.1} parent=0 // pred_check
    _
  $region7: #{ncdm_forward.1} parent=0 // pred_check_branch
    %20 = sbr.rel (0) target = $region9
  $region8: #{ncdm_forward.1} parent=0 // pred_region
    _
  $region9: #{ncdm_forward.1} parent=0 // pred_fallthru
    _
  // Predicated region
  $region10: #{ncdm_forward.1} parent=0 // pred_check
    _
  $region11: #{ncdm_forward.1} parent=0 // pred_check_branch
    %22 = sbr.rel (0) target = $region13
  $region12: #{ncdm_forward.1} parent=0 // pred_region
    _
  $region13: #{ncdm_forward.1} parent=0 // pred_fallthru
    _
  // Predicated region
  $region14: #{ncdm_forward.1} parent=0 // pred_check
    _
  $region15: #{ncdm_forward.1} parent=0 // pred_check_branch
    %24 = sbr.rel (0) target = $region17
  $region16: #{ncdm_forward.1} parent=0 // pred_region
    _
  $region17: #{ncdm_forward.1} parent=0 // pred_fallthru
    _
  // Predicated region
  $region18: #{ncdm_forward.1} parent=0 // pred_check
    _
  $region19: #{ncdm_forward.1} parent=0 // pred_check_branch
    %26 = sbr.rel (0) target = $region21
  $region20: #{ncdm_forward.1} parent=0 // pred_region
    _
  $region21: #{ncdm_forward.1} parent=0 // pred_fallthru
    _
  // Predicated region
  $region22: #{ncdm_forward.1} parent=0 // pred_check
    _
  $region23: #{ncdm_forward.1} parent=0 // pred_check_branch
    %28 = sbr.rel (0) target = $region25
  $region24: #{ncdm_forward.1} parent=0 // pred_region
    _
  $region25: #{ncdm_forward.1} parent=0 // pred_fallthru
    _
  // Predicated region
  $region26: #{ncdm_forward.1} parent=0 // pred_check
    _
  $region27: #{ncdm_forward.1} parent=0 // pred_check_branch
    %30 = sbr.rel (0) target = $region29
  $region28: #{ncdm_forward.1} parent=0 // pred_region
    _
  $region29: #{ncdm_forward.1} parent=0 // pred_fallthru
    _
  // Predicated region
  $region30: #{ncdm_forward.1} parent=0 // pred_check
    _
  $region31: #{ncdm_forward.1} parent=0 // pred_check_branch
    %32 = sbr.rel (0) target = $region33
  $region32: #{ncdm_forward.1} parent=0 // pred_region
    _
  $region33: #{ncdm_forward.1} parent=0 // pred_fallthru
    _
  // Predicated region
  $region34: #{ncdm_forward.1} parent=0 // pred_check
    _
  $region35: #{ncdm_forward.1} parent=0 // pred_check_branch
    %34 = sbr.rel (0) target = $region37
  $region36: #{ncdm_forward.1} parent=0 // pred_region
    _
  $region37: #{ncdm_forward.1} parent=0 // pred_fallthru
    _
  // Predicated region
  $region38: #{ncdm_forward.1} parent=0 // pred_check
    _
  $region39: #{ncdm_forward.1} parent=0 // pred_check_branch
    %36 = sbr.rel (0) target = $region41
  $region40: #{ncdm_forward.1} parent=0 // pred_region
    _
  $region41: #{ncdm_forward.1} parent=0 // pred_fallthru
    _
  %v37 = vld [vmem:[%s0] sm:$0xff]
  %v38 = vld [vmem:[%s0 + $0x8] sm:$0xff]
  %v39 = vld [vmem:[%s0 + $0x10] sm:$0xff]
  %v40 = vld [vmem:[%s0 + $0x18] sm:$0xff]
  %v41 = vld [vmem:[%s0 + $0x20] sm:$0xff]
  %v42 = vld [vmem:[%s0 + $0x28] sm:$0xff]
  %v43 = vld [vmem:[%s0 + $0x30] sm:$0xff]
  %v44 = vld [vmem:[%s0 + $0x38] sm:$0xff]
  %v45 = vld [vmem:[%s0 + $0x40] sm:$0xff]
  %v46 = vld [vmem:[%s0 + $0x48] sm:$0xff]
  %v47 = vld [vmem:[%s0 + $0x50] sm:$0xff]
  %v48 = vld [vmem:[%s0 + $0x58] sm:$0xff]
  %v49 = vld [vmem:[%s0 + $0x60] sm:$0xff]
  %v50 = vld [vmem:[%s0 + $0x68] sm:$0xff]
  %v51 = vld [vmem:[%s0 + $0x70] sm:$0xff]
  %v52 = vld [vmem:[%s0 + $0x78] sm:$0xff]
  %v53 = vxor.u32 %v37, 2147483648
  %v54 = vxor.u32 %v38, 2147483648
  %v55 = vxor.u32 %v39, 2147483648
  %v56 = vxor.u32 %v40, 2147483648
  %v57 = vxor.u32 %v41, 2147483648
  %v58 = vxor.u32 %v42, 2147483648
  %v59 = vxor.u32 %v43, 2147483648
  %v60 = vxor.u32 %v44, 2147483648
  %v61 = vxor.u32 %v45, 2147483648
  %v62 = vxor.u32 %v46, 2147483648
  %v63 = vxor.u32 %v47, 2147483648
  %v64 = vxor.u32 %v48, 2147483648
  %v65 = vxor.u32 %v49, 2147483648
  %v66 = vxor.u32 %v50, 2147483648
  %v67 = vxor.u32 %v51, 2147483648
  %v68 = vxor.u32 %v52, 2147483648
  %v69 = vmul.f32 %v53, 1.442695
  %v70 = vpow.pop %v69
  %v71 = vmul.f32 %v54, 1.442695
  %v72 = vpow.pop %v71
  %v73 = vmul.f32 %v55, 1.442695
  %v74 = vpow.pop %v73
  %v75 = vmul.f32 %v56, 1.442695
  %v76 = vpow.pop %v75
  %v77 = vmul.f32 %v57, 1.442695
  %v78 = vpow.pop %v77
  %v79 = vmul.f32 %v58, 1.442695
  %v80 = vpow.pop %v79
  %v81 = vmul.f32 %v59, 1.442695
  %v82 = vpow.pop %v81
  %v83 = vmul.f32 %v60, 1.442695
  %v84 = vpow.pop %v83
  %v85 = vmul.f32 %v61, 1.442695
  %v86 = vpow.pop %v85
  %v87 = vmul.f32 %v62, 1.442695
  %v88 = vpow.pop %v87
  %v89 = vmul.f32 %v63, 1.442695
  %v90 = vpow.pop %v89
  %v91 = vmul.f32 %v64, 1.442695
  %v92 = vpow.pop %v91
  %v93 = vmul.f32 %v65, 1.442695
  %v94 = vpow.pop %v93
  %v95 = vmul.f32 %v66, 1.442695
  %v96 = vpow.pop %v95
  %v97 = vmul.f32 %v67, 1.442695
  %v98 = vpow.pop %v97
  %v99 = vmul.f32 %v68, 1.442695
  %v100 = vpow.pop %v99
  %v101 = vadd.f32 %v70, 1.0
  %v102 = vadd.f32 %v72, 1.0
  %v103 = vadd.f32 %v74, 1.0
  %v104 = vadd.f32 %v76, 1.0
  %v105 = vadd.f32 %v78, 1.0
  %v106 = vadd.f32 %v80, 1.0
  %v107 = vadd.f32 %v82, 1.0
  %v108 = vadd.f32 %v84, 1.0
  %v109 = vadd.f32 %v86, 1.0
  %v110 = vadd.f32 %v88, 1.0
  %v111 = vadd.f32 %v90, 1.0
  %v112 = vadd.f32 %v92, 1.0
  %v113 = vadd.f32 %v94, 1.0
  %v114 = vadd.f32 %v96, 1.0
  %v115 = vadd.f32 %v98, 1.0
  %v116 = vadd.f32 %v100, 1.0
  %v117 = vrcp.pop %v101
  %v118 = vmul.f32 1.0, %v117
  %v119 = vrcp.pop %v102
  %v120 = vmul.f32 1.0, %v119
  %v121 = vrcp.pop %v103
  %v122 = vmul.f32 1.0, %v121
  %v123 = vrcp.pop %v104
  %v124 = vmul.f32 1.0, %v123
  %v125 = vrcp.pop %v105
  %v126 = vmul.f32 1.0, %v125
  %v127 = vrcp.pop %v106
  %v128 = vmul.f32 1.0, %v127
  %v129 = vrcp.pop %v107
  %v130 = vmul.f32 1.0, %v129
  %v131 = vrcp.pop %v108
  %v132 = vmul.f32 1.0, %v131
  %v133 = vrcp.pop %v109
  %v134 = vmul.f32 1.0, %v133
  %v135 = vrcp.pop %v110
  %v136 = vmul.f32 1.0, %v135
  %v137 = vrcp.pop %v111
  %v138 = vmul.f32 1.0, %v137
  %v139 = vrcp.pop %v112
  %v140 = vmul.f32 1.0, %v139
  %v141 = vrcp.pop %v113
  %v142 = vmul.f32 1.0, %v141
  %v143 = vrcp.pop %v114
  %v144 = vmul.f32 1.0, %v143
  %v145 = vrcp.pop %v115
  %v146 = vmul.f32 1.0, %v145
  %v147 = vrcp.pop %v116
  %v148 = vmul.f32 1.0, %v147
  %v149 = vld [vmem:[%s1] sm:$0xff]
  %v150 = vld [vmem:[%s1 + $0x8] sm:$0xff]
  %v151 = vld [vmem:[%s1 + $0x10] sm:$0xff]
  %v152 = vld [vmem:[%s1 + $0x18] sm:$0xff]
  %v153 = vld [vmem:[%s1 + $0x20] sm:$0xff]
  %v154 = vld [vmem:[%s1 + $0x28] sm:$0xff]
  %v155 = vld [vmem:[%s1 + $0x30] sm:$0xff]
  %v156 = vld [vmem:[%s1 + $0x38] sm:$0xff]
  %v157 = vld [vmem:[%s1 + $0x40] sm:$0xff]
  %v158 = vld [vmem:[%s1 + $0x48] sm:$0xff]
  %v159 = vld [vmem:[%s1 + $0x50] sm:$0xff]
  %v160 = vld [vmem:[%s1 + $0x58] sm:$0xff]
  %v161 = vld [vmem:[%s1 + $0x60] sm:$0xff]
  %v162 = vld [vmem:[%s1 + $0x68] sm:$0xff]
  %v163 = vld [vmem:[%s1 + $0x70] sm:$0xff]
  %v164 = vld [vmem:[%s1 + $0x78] sm:$0xff]
  %v165 = vxor.u32 %v149, 2147483648
  %v166 = vxor.u32 %v150, 2147483648
  %v167 = vxor.u32 %v151, 2147483648
  %v168 = vxor.u32 %v152, 2147483648
  %v169 = vxor.u32 %v153, 2147483648
  %v170 = vxor.u32 %v154, 2147483648
  %v171 = vxor.u32 %v155, 2147483648
  %v172 = vxor.u32 %v156, 2147483648
  %v173 = vxor.u32 %v157, 2147483648
  %v174 = vxor.u32 %v158, 2147483648
  %v175 = vxor.u32 %v159, 2147483648
  %v176 = vxor.u32 %v160, 2147483648
  %v177 = vxor.u32 %v161, 2147483648
  %v178 = vxor.u32 %v162, 2147483648
  %v179 = vxor.u32 %v163, 2147483648
  %v180 = vxor.u32 %v164, 2147483648
  %v181 = vmul.f32 %v165, 1.442695
  %v182 = vpow.pop %v181
  %v183 = vmul.f32 %v166, 1.442695
  %v184 = vpow.pop %v183
  %v185 = vmul.f32 %v167, 1.442695
  %v186 = vpow.pop %v185
  %v187 = vmul.f32 %v168, 1.442695
  %v188 = vpow.pop %v187
  %v189 = vmul.f32 %v169, 1.442695
  %v190 = vpow.pop %v189
  %v191 = vmul.f32 %v170, 1.442695
  %v192 = vpow.pop %v191
  %v193 = vmul.f32 %v171, 1.442695
  %v194 = vpow.pop %v193
  %v195 = vmul.f32 %v172, 1.442695
  %v196 = vpow.pop %v195
  %v197 = vmul.f32 %v173, 1.442695
  %v198 = vpow.pop %v197
  %v199 = vmul.f32 %v174, 1.442695
  %v200 = vpow.pop %v199
  %v201 = vmul.f32 %v175, 1.442695
  %v202 = vpow.pop %v201
  %v203 = vmul.f32 %v176, 1.442695
  %v204 = vpow.pop %v203
  %v205 = vmul.f32 %v177, 1.442695
  %v206 = vpow.pop %v205
  %v207 = vmul.f32 %v178, 1.442695
  %v208 = vpow.pop %v207
  %v209 = vmul.f32 %v179, 1.442695
  %v210 = vpow.pop %v209
  %v211 = vmul.f32 %v180, 1.442695
  %v212 = vpow.pop %v211
  %v213 = vadd.f32 %v182, 1.0
  %v214 = vadd.f32 %v184, 1.0
  %v215 = vadd.f32 %v186, 1.0
  %v216 = vadd.f32 %v188, 1.0
  %v217 = vadd.f32 %v190, 1.0
  %v218 = vadd.f32 %v192, 1.0
  %v219 = vadd.f32 %v194, 1.0
  %v220 = vadd.f32 %v196, 1.0
  %v221 = vadd.f32 %v198, 1.0
  %v222 = vadd.f32 %v200, 1.0
  %v223 = vadd.f32 %v202, 1.0
  %v224 = vadd.f32 %v204, 1.0
  %v225 = vadd.f32 %v206, 1.0
  %v226 = vadd.f32 %v208, 1.0
  %v227 = vadd.f32 %v210, 1.0
  %v228 = vadd.f32 %v212, 1.0
  %v229 = vrcp.pop %v213
  %v230 = vmul.f32 1.0, %v229
  %v231 = vrcp.pop %v214
  %v232 = vmul.f32 1.0, %v231
  %v233 = vrcp.pop %v215
  %v234 = vmul.f32 1.0, %v233
  %v235 = vrcp.pop %v216
  %v236 = vmul.f32 1.0, %v235
  %v237 = vrcp.pop %v217
  %v238 = vmul.f32 1.0, %v237
  %v239 = vrcp.pop %v218
  %v240 = vmul.f32 1.0, %v239
  %v241 = vrcp.pop %v219
  %v242 = vmul.f32 1.0, %v241
  %v243 = vrcp.pop %v220
  %v244 = vmul.f32 1.0, %v243
  %v245 = vrcp.pop %v221
  %v246 = vmul.f32 1.0, %v245
  %v247 = vrcp.pop %v222
  %v248 = vmul.f32 1.0, %v247
  %v249 = vrcp.pop %v223
  %v250 = vmul.f32 1.0, %v249
  %v251 = vrcp.pop %v224
  %v252 = vmul.f32 1.0, %v251
  %v253 = vrcp.pop %v225
  %v254 = vmul.f32 1.0, %v253
  %v255 = vrcp.pop %v226
  %v256 = vmul.f32 1.0, %v255
  %v257 = vrcp.pop %v227
  %v258 = vmul.f32 1.0, %v257
  %v259 = vrcp.pop %v228
  %v260 = vmul.f32 1.0, %v259
  %v261 = vld [vmem:[%s2] sm:$0xff]
  %v262 = vld [vmem:[%s2 + $0x8] sm:$0xff]
  %v263 = vld [vmem:[%s2 + $0x10] sm:$0xff]
  %v264 = vld [vmem:[%s2 + $0x18] sm:$0xff]
  %v265 = vld [vmem:[%s2 + $0x20] sm:$0xff]
  %v266 = vld [vmem:[%s2 + $0x28] sm:$0xff]
  %v267 = vld [vmem:[%s2 + $0x30] sm:$0xff]
  %v268 = vld [vmem:[%s2 + $0x38] sm:$0xff]
  %v269 = vld [vmem:[%s2 + $0x40] sm:$0xff]
  %v270 = vld [vmem:[%s2 + $0x48] sm:$0xff]
  %v271 = vld [vmem:[%s2 + $0x50] sm:$0xff]
  %v272 = vld [vmem:[%s2 + $0x58] sm:$0xff]
  %v273 = vld [vmem:[%s2 + $0x60] sm:$0xff]
  %v274 = vld [vmem:[%s2 + $0x68] sm:$0xff]
  %v275 = vld [vmem:[%s2 + $0x70] sm:$0xff]
  %v276 = vld [vmem:[%s2 + $0x78] sm:$0xff]
  %v277 = vxor.u32 %v261, 2147483648
  %v278 = vxor.u32 %v262, 2147483648
  %v279 = vxor.u32 %v263, 2147483648
  %v280 = vxor.u32 %v264, 2147483648
  %v281 = vxor.u32 %v265, 2147483648
  %v282 = vxor.u32 %v266, 2147483648
  %v283 = vxor.u32 %v267, 2147483648
  %v284 = vxor.u32 %v268, 2147483648
  %v285 = vxor.u32 %v269, 2147483648
  %v286 = vxor.u32 %v270, 2147483648
  %v287 = vxor.u32 %v271, 2147483648
  %v288 = vxor.u32 %v272, 2147483648
  %v289 = vxor.u32 %v273, 2147483648
  %v290 = vxor.u32 %v274, 2147483648
  %v291 = vxor.u32 %v275, 2147483648
  %v292 = vxor.u32 %v276, 2147483648
  %v293 = vmul.f32 %v277, 1.442695
  %v294 = vpow.pop %v293
  %v295 = vmul.f32 %v278, 1.442695
  %v296 = vpow.pop %v295
  %v297 = vmul.f32 %v279, 1.442695
  %v298 = vpow.pop %v297
  %v299 = vmul.f32 %v280, 1.442695
  %v300 = vpow.pop %v299
  %v301 = vmul.f32 %v281, 1.442695
  %v302 = vpow.pop %v301
  %v303 = vmul.f32 %v282, 1.442695
  %v304 = vpow.pop %v303
  %v305 = vmul.f32 %v283, 1.442695
  %v306 = vpow.pop %v305
  %v307 = vmul.f32 %v284, 1.442695
  %v308 = vpow.pop %v307
  %v309 = vmul.f32 %v285, 1.442695
  %v310 = vpow.pop %v309
  %v311 = vmul.f32 %v286, 1.442695
  %v312 = vpow.pop %v311
  %v313 = vmul.f32 %v287, 1.442695
  %v314 = vpow.pop %v313
  %v315 = vmul.f32 %v288, 1.442695
  %v316 = vpow.pop %v315
  %v317 = vmul.f32 %v289, 1.442695
  %v318 = vpow.pop %v317
  %v319 = vmul.f32 %v290, 1.442695
  %v320 = vpow.pop %v319
  %v321 = vmul.f32 %v291, 1.442695
  %v322 = vpow.pop %v321
  %v323 = vmul.f32 %v292, 1.442695
  %v324 = vpow.pop %v323
  %v325 = vadd.f32 %v294, 1.0
  %v326 = vadd.f32 %v296, 1.0
  %v327 = vadd.f32 %v298, 1.0
  %v328 = vadd.f32 %v300, 1.0
  %v329 = vadd.f32 %v302, 1.0
  %v330 = vadd.f32 %v304, 1.0
  %v331 = vadd.f32 %v306, 1.0
  %v332 = vadd.f32 %v308, 1.0
  %v333 = vadd.f32 %v310, 1.0
  %v334 = vadd.f32 %v312, 1.0
  %v335 = vadd.f32 %v314, 1.0
  %v336 = vadd.f32 %v316, 1.0
  %v337 = vadd.f32 %v318, 1.0
  %v338 = vadd.f32 %v320, 1.0
  %v339 = vadd.f32 %v322, 1.0
  %v340 = vadd.f32 %v324, 1.0
  %v341 = vrcp.pop %v325
  %v342 = vmul.f32 1.0, %v341
  %v343 = vrcp.pop %v326
  %v344 = vmul.f32 1.0, %v343
  %v345 = vrcp.pop %v327
  %v346 = vmul.f32 1.0, %v345
  %v347 = vrcp.pop %v328
  %v348 = vmul.f32 1.0, %v347
  %v349 = vrcp.pop %v329
  %v350 = vmul.f32 1.0, %v349
  %v351 = vrcp.pop %v330
  %v352 = vmul.f32 1.0, %v351
  %v353 = vrcp.pop %v331
  %v354 = vmul.f32 1.0, %v353
  %v355 = vrcp.pop %v332
  %v356 = vmul.f32 1.0, %v355
  %v357 = vrcp.pop %v333
  %v358 = vmul.f32 1.0, %v357
  %v359 = vrcp.pop %v334
  %v360 = vmul.f32 1.0, %v359
  %v361 = vrcp.pop %v335
  %v362 = vmul.f32 1.0, %v361
  %v363 = vrcp.pop %v336
  %v364 = vmul.f32 1.0, %v363
  %v365 = vrcp.pop %v337
  %v366 = vmul.f32 1.0, %v365
  %v367 = vrcp.pop %v338
  %v368 = vmul.f32 1.0, %v367
  %v369 = vrcp.pop %v339
  %v370 = vmul.f32 1.0, %v369
  %v371 = vrcp.pop %v340
  %v372 = vmul.f32 1.0, %v371
  %v373 = vsub.f32 %v118, %v230
  %v374 = vsub.f32 %v120, %v232
  %v375 = vsub.f32 %v122, %v234
  %v376 = vsub.f32 %v124, %v236
  %v377 = vsub.f32 %v126, %v238
  %v378 = vsub.f32 %v128, %v240
  %v379 = vsub.f32 %v130, %v242
  %v380 = vsub.f32 %v132, %v244
  %v381 = vsub.f32 %v134, %v246
  %v382 = vsub.f32 %v136, %v248
  %v383 = vsub.f32 %v138, %v250
  %v384 = vsub.f32 %v140, %v252
  %v385 = vsub.f32 %v142, %v254
  %v386 = vsub.f32 %v144, %v256
  %v387 = vsub.f32 %v146, %v258
  %v388 = vsub.f32 %v148, %v260
  %390 = vset.pattern.permute.xlu0 0
  %391 = vperm.xlu0 %390, %v342
  %v392 = vpop.permute.xlu0 %391
  %395 = vset.pattern.permute.xlu0 0
  %396 = vperm.xlu0 %395, %v344
  %v397 = vpop.permute.xlu0 %396
  %400 = vset.pattern.permute.xlu0 0
  %401 = vperm.xlu0 %400, %v346
  %v402 = vpop.permute.xlu0 %401
  %405 = vset.pattern.permute.xlu0 0
  %406 = vperm.xlu0 %405, %v348
  %v407 = vpop.permute.xlu0 %406
  %410 = vset.pattern.permute.xlu0 0
  %411 = vperm.xlu0 %410, %v350
  %v412 = vpop.permute.xlu0 %411
  %415 = vset.pattern.permute.xlu0 0
  %416 = vperm.xlu0 %415, %v352
  %v417 = vpop.permute.xlu0 %416
  %420 = vset.pattern.permute.xlu0 0
  %421 = vperm.xlu0 %420, %v354
  %v422 = vpop.permute.xlu0 %421
  %425 = vset.pattern.permute.xlu0 0
  %426 = vperm.xlu0 %425, %v356
  %v427 = vpop.permute.xlu0 %426
  %430 = vset.pattern.permute.xlu0 0
  %431 = vperm.xlu0 %430, %v358
  %v432 = vpop.permute.xlu0 %431
  %435 = vset.pattern.permute.xlu0 0
  %436 = vperm.xlu0 %435, %v360
  %v437 = vpop.permute.xlu0 %436
  %440 = vset.pattern.permute.xlu0 0
  %441 = vperm.xlu0 %440, %v362
  %v442 = vpop.permute.xlu0 %441
  %445 = vset.pattern.permute.xlu0 0
  %446 = vperm.xlu0 %445, %v364
  %v447 = vpop.permute.xlu0 %446
  %450 = vset.pattern.permute.xlu0 0
  %451 = vperm.xlu0 %450, %v366
  %v452 = vpop.permute.xlu0 %451
  %455 = vset.pattern.permute.xlu0 0
  %456 = vperm.xlu0 %455, %v368
  %v457 = vpop.permute.xlu0 %456
  %460 = vset.pattern.permute.xlu0 0
  %461 = vperm.xlu0 %460, %v370
  %v462 = vpop.permute.xlu0 %461
  %465 = vset.pattern.permute.xlu0 0
  %466 = vperm.xlu0 %465, %v372
  %v467 = vpop.permute.xlu0 %466
  %v469 = vmul.f32 %v392, %v373
  %v470 = vmul.f32 %v397, %v374
  %v471 = vmul.f32 %v402, %v375
  %v472 = vmul.f32 %v407, %v376
  %v473 = vmul.f32 %v412, %v377
  %v474 = vmul.f32 %v417, %v378
  %v475 = vmul.f32 %v422, %v379
  %v476 = vmul.f32 %v427, %v380
  %v477 = vmul.f32 %v432, %v381
  %v478 = vmul.f32 %v437, %v382
  %v479 = vmul.f32 %v442, %v383
  %v480 = vmul.f32 %v447, %v384
  %v481 = vmul.f32 %v452, %v385
  %v482 = vmul.f32 %v457, %v386
  %v483 = vmul.f32 %v462, %v387
  %v484 = vmul.f32 %v467, %v388
  %v485 = vld [vmem:[%s3] sm:$0xff]
  %v486 = vld [vmem:[%s3 + $0x8] sm:$0xff]
  %v487 = vld [vmem:[%s3 + $0x10] sm:$0xff]
  %v488 = vld [vmem:[%s3 + $0x18] sm:$0xff]
  %v489 = vld [vmem:[%s3 + $0x20] sm:$0xff]
  %v490 = vld [vmem:[%s3 + $0x28] sm:$0xff]
  %v491 = vld [vmem:[%s3 + $0x30] sm:$0xff]
  %v492 = vld [vmem:[%s3 + $0x38] sm:$0xff]
  %v493 = vld [vmem:[%s3 + $0x40] sm:$0xff]
  %v494 = vld [vmem:[%s3 + $0x48] sm:$0xff]
  %v495 = vld [vmem:[%s3 + $0x50] sm:$0xff]
  %v496 = vld [vmem:[%s3 + $0x58] sm:$0xff]
  %v497 = vld [vmem:[%s3 + $0x60] sm:$0xff]
  %v498 = vld [vmem:[%s3 + $0x68] sm:$0xff]
  %v499 = vld [vmem:[%s3 + $0x70] sm:$0xff]
  %v500 = vld [vmem:[%s3 + $0x78] sm:$0xff]
  %v501 = vmul.f32 %v469, %v485
  %v502 = vmul.f32 %v470, %v486
  %v503 = vmul.f32 %v471, %v487
  %v504 = vmul.f32 %v472, %v488
  %v505 = vmul.f32 %v473, %v489
  %v506 = vmul.f32 %v474, %v490
  %v507 = vmul.f32 %v475, %v491
  %v508 = vmul.f32 %v476, %v492
  %v509 = vmul.f32 %v477, %v493
  %v510 = vmul.f32 %v478, %v494
  %v511 = vmul.f32 %v479, %v495
  %v512 = vmul.f32 %v480, %v496
  %v513 = vmul.f32 %v481, %v497
  %v514 = vmul.f32 %v482, %v498
  %v515 = vmul.f32 %v483, %v499
  %v516 = vmul.f32 %v484, %v500
  %v517 = vld [vmem:[%s4] sm:$0xff]
  %v518 = vld [vmem:[%s4 + $0x8] sm:$0xff]
  %v519 = vld [vmem:[%s4 + $0x10] sm:$0xff]
  %v520 = vld [vmem:[%s4 + $0x18] sm:$0xff]
  %v521 = vld [vmem:[%s4 + $0x20] sm:$0xff]
  %v522 = vld [vmem:[%s4 + $0x28] sm:$0xff]
  %v523 = vld [vmem:[%s4 + $0x30] sm:$0xff]
  %v524 = vld [vmem:[%s4 + $0x38] sm:$0xff]
  %v525 = vld [vmem:[%s4 + $0x40] sm:$0xff]
  %v526 = vld [vmem:[%s4 + $0x48] sm:$0xff]
  %v527 = vld [vmem:[%s4 + $0x50] sm:$0xff]
  %v528 = vld [vmem:[%s4 + $0x58] sm:$0xff]
  %v529 = vld [vmem:[%s4 + $0x60] sm:$0xff]
  %v530 = vld [vmem:[%s4 + $0x68] sm:$0xff]
  %v531 = vld [vmem:[%s4 + $0x70] sm:$0xff]
  %v532 = vld [vmem:[%s4 + $0x78] sm:$0xff]
  %v533 = vld [vmem:[%s5] sm:$0x1]
  %v535 = vlaneseq
  %v536 = vshrl.u32 %v535, 7
  %v537 = vsub.s32 0, %v536
  %v538 = vrot.slane %v533, %v537
  %540 = vmatprep.subr.mxu0 0.0
  %541 = vmatpush1.msra.mxu0 %v532
  %542 = vmatprep.subr.mxu0 0.0
  %543 = vmatpush1.msra.mxu0 %v531
  %544 = vmatprep.subr.mxu0 0.0
  %545 = vmatpush1.msra.mxu0 %v530
  %546 = vmatprep.subr.mxu0 0.0
  %547 = vmatpush1.msra.mxu0 %v529
  %548 = vmatprep.subr.mxu0 0.0
  %549 = vmatpush1.msra.mxu0 %v528
  %550 = vmatprep.subr.mxu0 0.0
  %551 = vmatpush1.msra.mxu0 %v527
  %552 = vmatprep.subr.mxu0 0.0
  %553 = vmatpush1.msra.mxu0 %v526
  %554 = vmatprep.subr.mxu0 0.0
  %555 = vmatpush1.msra.mxu0 %v525
  %556 = vmatprep.subr.mxu0 0.0
  %557 = vmatpush1.msra.mxu0 %v524
  %558 = vmatprep.subr.mxu0 0.0
  %559 = vmatpush1.msra.mxu0 %v523
  %560 = vmatprep.subr.mxu0 0.0
  %561 = vmatpush1.msra.mxu0 %v522
  %562 = vmatprep.subr.mxu0 0.0
  %563 = vmatpush1.msra.mxu0 %v521
  %564 = vmatprep.subr.mxu0 0.0
  %565 = vmatpush1.msra.mxu0 %v520
  %566 = vmatprep.subr.mxu0 0.0
  %567 = vmatpush1.msra.mxu0 %v519
  %568 = vmatprep.subr.mxu0 0.0
  %569 = vmatpush1.msra.mxu0 %v518
  %570 = vmatprep.subr.mxu0 0.0
  %571 = vmatpush1.msra.mxu0 %v517
  %572 = vmatprep.subr.mxu0 0.0
  %573 = vmatpush2.msra.mxu0 0.0
  %574 = vmatprep.subr.mxu0 0.0
  %575 = vmatpush2.msra.mxu0 0.0
  %576 = vmatprep.subr.mxu0 0.0
  %577 = vmatpush2.msra.mxu0 0.0
  %578 = vmatprep.subr.mxu0 0.0
  %579 = vmatpush2.msra.mxu0 0.0
  %580 = vmatprep.subr.mxu0 0.0
  %581 = vmatpush2.msra.mxu0 0.0
  %582 = vmatprep.subr.mxu0 0.0
  %583 = vmatpush2.msra.mxu0 0.0
  %584 = vmatprep.subr.mxu0 0.0
  %585 = vmatpush2.msra.mxu0 0.0
  %586 = vmatprep.subr.mxu0 0.0
  %587 = vmatpush2.msra.mxu0 0.0
  %588 = vmatprep.subr.mxu0 0.0
  %589 = vmatpush2.msra.mxu0 0.0
  %590 = vmatprep.subr.mxu0 0.0
  %591 = vmatpush2.msra.mxu0 0.0
  %592 = vmatprep.subr.mxu0 0.0
  %593 = vmatpush2.msra.mxu0 0.0
  %594 = vmatprep.subr.mxu0 0.0
  %595 = vmatpush2.msra.mxu0 0.0
  %596 = vmatprep.subr.mxu0 0.0
  %597 = vmatpush2.msra.mxu0 0.0
  %598 = vmatprep.subr.mxu0 0.0
  %599 = vmatpush2.msra.mxu0 0.0
  %600 = vmatprep.subr.mxu0 0.0
  %601 = vmatpush2.msra.mxu0 0.0
  %602 = vmatprep.subr.mxu0 0.0
  %603 = vmatpush2.msra.mxu0 0.0
  %604 = vmatprep.mubr.f32.mxu0 0.0
  %605 = vmatmul.mubr.f32.gmra.mxu0 %v501
  %v606 = vpop.f32.mrf.mxu0
  %v607 = vadd.f32 %v538, %v606
  %v608 = vpop.f32.mrf.mxu0
  %609 = vmatprep.mubr.f32.mxu0 0.0
  %610 = vmatmul.mubr.f32.gmra.mxu0 %v502
  %v611 = vpop.f32.mrf.mxu0
  %v612 = vadd.f32 %v538, %v611
  %v613 = vpop.f32.mrf.mxu0
  %614 = vmatprep.mubr.f32.mxu0 0.0
  %615 = vmatmul.mubr.f32.gmra.mxu0 %v503
  %v616 = vpop.f32.mrf.mxu0
  %v617 = vadd.f32 %v538, %v616
  %v618 = vpop.f32.mrf.mxu0
  %619 = vmatprep.mubr.f32.mxu0 0.0
  %620 = vmatmul.mubr.f32.gmra.mxu0 %v504
  %v621 = vpop.f32.mrf.mxu0
  %v622 = vadd.f32 %v538, %v621
  %v623 = vpop.f32.mrf.mxu0
  %624 = vmatprep.mubr.f32.mxu0 0.0
  %625 = vmatmul.mubr.f32.gmra.mxu0 %v505
  %v626 = vpop.f32.mrf.mxu0
  %v627 = vadd.f32 %v538, %v626
  %v628 = vpop.f32.mrf.mxu0
  %629 = vmatprep.mubr.f32.mxu0 0.0
  %630 = vmatmul.mubr.f32.gmra.mxu0 %v506
  %v631 = vpop.f32.mrf.mxu0
  %v632 = vadd.f32 %v538, %v631
  %v633 = vpop.f32.mrf.mxu0
  %634 = vmatprep.mubr.f32.mxu0 0.0
  %635 = vmatmul.mubr.f32.gmra.mxu0 %v507
  %v636 = vpop.f32.mrf.mxu0
  %v637 = vadd.f32 %v538, %v636
  %v638 = vpop.f32.mrf.mxu0
  %639 = vmatprep.mubr.f32.mxu0 0.0
  %640 = vmatmul.mubr.f32.gmra.mxu0 %v508
  %v641 = vpop.f32.mrf.mxu0
  %v642 = vadd.f32 %v538, %v641
  %v643 = vpop.f32.mrf.mxu0
  %644 = vmatprep.mubr.f32.mxu0 0.0
  %645 = vmatmul.mubr.f32.gmra.mxu0 %v509
  %v646 = vpop.f32.mrf.mxu0
  %v647 = vadd.f32 %v538, %v646
  %v648 = vpop.f32.mrf.mxu0
  %649 = vmatprep.mubr.f32.mxu0 0.0
  %650 = vmatmul.mubr.f32.gmra.mxu0 %v510
  %v651 = vpop.f32.mrf.mxu0
  %v652 = vadd.f32 %v538, %v651
  %v653 = vpop.f32.mrf.mxu0
  %654 = vmatprep.mubr.f32.mxu0 0.0
  %655 = vmatmul.mubr.f32.gmra.mxu0 %v511
  %v656 = vpop.f32.mrf.mxu0
  %v657 = vadd.f32 %v538, %v656
  %v658 = vpop.f32.mrf.mxu0
  %659 = vmatprep.mubr.f32.mxu0 0.0
  %660 = vmatmul.mubr.f32.gmra.mxu0 %v512
  %v661 = vpop.f32.mrf.mxu0
  %v662 = vadd.f32 %v538, %v661
  %v663 = vpop.f32.mrf.mxu0
  %664 = vmatprep.mubr.f32.mxu0 0.0
  %665 = vmatmul.mubr.f32.gmra.mxu0 %v513
  %v666 = vpop.f32.mrf.mxu0
  %v667 = vadd.f32 %v538, %v666
  %v668 = vpop.f32.mrf.mxu0
  %669 = vmatprep.mubr.f32.mxu0 0.0
  %670 = vmatmul.mubr.f32.gmra.mxu0 %v514
  %v671 = vpop.f32.mrf.mxu0
  %v672 = vadd.f32 %v538, %v671
  %v673 = vpop.f32.mrf.mxu0
  %674 = vmatprep.mubr.f32.mxu0 0.0
  %675 = vmatmul.mubr.f32.gmra.mxu0 %v515
  %v676 = vpop.f32.mrf.mxu0
  %v677 = vadd.f32 %v538, %v676
  %v678 = vpop.f32.mrf.mxu0
  %679 = vmatprep.mubr.f32.mxu0 0.0
  %680 = vmatmul.mubr.f32.gmra.mxu0 %v516
  %v681 = vpop.f32.mrf.mxu0
  %v682 = vadd.f32 %v538, %v681
  %v683 = vpop.f32.mrf.mxu0
  %684 = vdwg.mxu0
  %v685 = vxor.u32 %v607, 2147483648
  %v686 = vxor.u32 %v612, 2147483648
  %v687 = vxor.u32 %v617, 2147483648
  %v688 = vxor.u32 %v622, 2147483648
  %v689 = vxor.u32 %v627, 2147483648
  %v690 = vxor.u32 %v632, 2147483648
  %v691 = vxor.u32 %v637, 2147483648
  %v692 = vxor.u32 %v642, 2147483648
  %v693 = vxor.u32 %v647, 2147483648
  %v694 = vxor.u32 %v652, 2147483648
  %v695 = vxor.u32 %v657, 2147483648
  %v696 = vxor.u32 %v662, 2147483648
  %v697 = vxor.u32 %v667, 2147483648
  %v698 = vxor.u32 %v672, 2147483648
  %v699 = vxor.u32 %v677, 2147483648
  %v700 = vxor.u32 %v682, 2147483648
  %v701 = vmul.f32 %v685, 1.442695
  %v702 = vpow.pop %v701
  %v703 = vmul.f32 %v686, 1.442695
  %v704 = vpow.pop %v703
  %v705 = vmul.f32 %v687, 1.442695
  %v706 = vpow.pop %v705
  %v707 = vmul.f32 %v688, 1.442695
  %v708 = vpow.pop %v707
  %v709 = vmul.f32 %v689, 1.442695
  %v710 = vpow.pop %v709
  %v711 = vmul.f32 %v690, 1.442695
  %v712 = vpow.pop %v711
  %v713 = vmul.f32 %v691, 1.442695
  %v714 = vpow.pop %v713
  %v715 = vmul.f32 %v692, 1.442695
  %v716 = vpow.pop %v715
  %v717 = vmul.f32 %v693, 1.442695
  %v718 = vpow.pop %v717
  %v719 = vmul.f32 %v694, 1.442695
  %v720 = vpow.pop %v719
  %v721 = vmul.f32 %v695, 1.442695
  %v722 = vpow.pop %v721
  %v723 = vmul.f32 %v696, 1.442695
  %v724 = vpow.pop %v723
  %v725 = vmul.f32 %v697, 1.442695
  %v726 = vpow.pop %v725
  %v727 = vmul.f32 %v698, 1.442695
  %v728 = vpow.pop %v727
  %v729 = vmul.f32 %v699, 1.442695
  %v730 = vpow.pop %v729
  %v731 = vmul.f32 %v700, 1.442695
  %v732 = vpow.pop %v731
  %v733 = vadd.f32 %v702, 1.0
  %v734 = vadd.f32 %v704, 1.0
  %v735 = vadd.f32 %v706, 1.0
  %v736 = vadd.f32 %v708, 1.0
  %v737 = vadd.f32 %v710, 1.0
  %v738 = vadd.f32 %v712, 1.0
  %v739 = vadd.f32 %v714, 1.0
  %v740 = vadd.f32 %v716, 1.0
  %v741 = vadd.f32 %v718, 1.0
  %v742 = vadd.f32 %v720, 1.0
  %v743 = vadd.f32 %v722, 1.0
  %v744 = vadd.f32 %v724, 1.0
  %v745 = vadd.f32 %v726, 1.0
  %v746 = vadd.f32 %v728, 1.0
  %v747 = vadd.f32 %v730, 1.0
  %v748 = vadd.f32 %v732, 1.0
  %v749 = vrcp.pop %v733
  %v750 = vmul.f32 1.0, %v749
  %v751 = vrcp.pop %v734
  %v752 = vmul.f32 1.0, %v751
  %v753 = vrcp.pop %v735
  %v754 = vmul.f32 1.0, %v753
  %v755 = vrcp.pop %v736
  %v756 = vmul.f32 1.0, %v755
  %v757 = vrcp.pop %v737
  %v758 = vmul.f32 1.0, %v757
  %v759 = vrcp.pop %v738
  %v760 = vmul.f32 1.0, %v759
  %v761 = vrcp.pop %v739
  %v762 = vmul.f32 1.0, %v761
  %v763 = vrcp.pop %v740
  %v764 = vmul.f32 1.0, %v763
  %v765 = vrcp.pop %v741
  %v766 = vmul.f32 1.0, %v765
  %v767 = vrcp.pop %v742
  %v768 = vmul.f32 1.0, %v767
  %v769 = vrcp.pop %v743
  %v770 = vmul.f32 1.0, %v769
  %v771 = vrcp.pop %v744
  %v772 = vmul.f32 1.0, %v771
  %v773 = vrcp.pop %v745
  %v774 = vmul.f32 1.0, %v773
  %v775 = vrcp.pop %v746
  %v776 = vmul.f32 1.0, %v775
  %v777 = vrcp.pop %v747
  %v778 = vmul.f32 1.0, %v777
  %v779 = vrcp.pop %v748
  %v780 = vmul.f32 1.0, %v779
  %v781 = vld [vmem:[%s6] sm:$0xff]
  %v782 = vld [vmem:[%s6 + $0x8] sm:$0xff]
  %v783 = vld [vmem:[%s6 + $0x10] sm:$0xff]
  %v784 = vld [vmem:[%s6 + $0x18] sm:$0xff]
  %v785 = vld [vmem:[%s6 + $0x20] sm:$0xff]
  %v786 = vld [vmem:[%s6 + $0x28] sm:$0xff]
  %v787 = vld [vmem:[%s6 + $0x30] sm:$0xff]
  %v788 = vld [vmem:[%s6 + $0x38] sm:$0xff]
  %v789 = vld [vmem:[%s6 + $0x40] sm:$0xff]
  %v790 = vld [vmem:[%s6 + $0x48] sm:$0xff]
  %v791 = vld [vmem:[%s6 + $0x50] sm:$0xff]
  %v792 = vld [vmem:[%s6 + $0x58] sm:$0xff]
  %v793 = vld [vmem:[%s6 + $0x60] sm:$0xff]
  %v794 = vld [vmem:[%s6 + $0x68] sm:$0xff]
  %v795 = vld [vmem:[%s6 + $0x70] sm:$0xff]
  %v796 = vld [vmem:[%s6 + $0x78] sm:$0xff]
  %v797 = vld [vmem:[%s7] sm:$0x1]
  %v799 = vlaneseq
  %v800 = vshrl.u32 %v799, 7
  %v801 = vsub.s32 0, %v800
  %v802 = vrot.slane %v797, %v801
  %804 = vmatprep.subr.mxu0 0.0
  %805 = vmatpush1.msra.mxu0 %v796
  %806 = vmatprep.subr.mxu0 0.0
  %807 = vmatpush1.msra.mxu0 %v795
  %808 = vmatprep.subr.mxu0 0.0
  %809 = vmatpush1.msra.mxu0 %v794
  %810 = vmatprep.subr.mxu0 0.0
  %811 = vmatpush1.msra.mxu0 %v793
  %812 = vmatprep.subr.mxu0 0.0
  %813 = vmatpush1.msra.mxu0 %v792
  %814 = vmatprep.subr.mxu0 0.0
  %815 = vmatpush1.msra.mxu0 %v791
  %816 = vmatprep.subr.mxu0 0.0
  %817 = vmatpush1.msra.mxu0 %v790
  %818 = vmatprep.subr.mxu0 0.0
  %819 = vmatpush1.msra.mxu0 %v789
  %820 = vmatprep.subr.mxu0 0.0
  %821 = vmatpush1.msra.mxu0 %v788
  %822 = vmatprep.subr.mxu0 0.0
  %823 = vmatpush1.msra.mxu0 %v787
  %824 = vmatprep.subr.mxu0 0.0
  %825 = vmatpush1.msra.mxu0 %v786
  %826 = vmatprep.subr.mxu0 0.0
  %827 = vmatpush1.msra.mxu0 %v785
  %828 = vmatprep.subr.mxu0 0.0
  %829 = vmatpush1.msra.mxu0 %v784
  %830 = vmatprep.subr.mxu0 0.0
  %831 = vmatpush1.msra.mxu0 %v783
  %832 = vmatprep.subr.mxu0 0.0
  %833 = vmatpush1.msra.mxu0 %v782
  %834 = vmatprep.subr.mxu0 0.0
  %835 = vmatpush1.msra.mxu0 %v781
  %836 = vmatprep.subr.mxu0 0.0
  %837 = vmatpush2.msra.mxu0 0.0
  %838 = vmatprep.subr.mxu0 0.0
  %839 = vmatpush2.msra.mxu0 0.0
  %840 = vmatprep.subr.mxu0 0.0
  %841 = vmatpush2.msra.mxu0 0.0
  %842 = vmatprep.subr.mxu0 0.0
  %843 = vmatpush2.msra.mxu0 0.0
  %844 = vmatprep.subr.mxu0 0.0
  %845 = vmatpush2.msra.mxu0 0.0
  %846 = vmatprep.subr.mxu0 0.0
  %847 = vmatpush2.msra.mxu0 0.0
  %848 = vmatprep.subr.mxu0 0.0
  %849 = vmatpush2.msra.mxu0 0.0
  %850 = vmatprep.subr.mxu0 0.0
  %851 = vmatpush2.msra.mxu0 0.0
  %852 = vmatprep.subr.mxu0 0.0
  %853 = vmatpush2.msra.mxu0 0.0
  %854 = vmatprep.subr.mxu0 0.0
  %855 = vmatpush2.msra.mxu0 0.0
  %856 = vmatprep.subr.mxu0 0.0
  %857 = vmatpush2.msra.mxu0 0.0
  %858 = vmatprep.subr.mxu0 0.0
  %859 = vmatpush2.msra.mxu0 0.0
  %860 = vmatprep.subr.mxu0 0.0
  %861 = vmatpush2.msra.mxu0 0.0
  %862 = vmatprep.subr.mxu0 0.0
  %863 = vmatpush2.msra.mxu0 0.0
  %864 = vmatprep.subr.mxu0 0.0
  %865 = vmatpush2.msra.mxu0 0.0
  %866 = vmatprep.subr.mxu0 0.0
  %867 = vmatpush2.msra.mxu0 0.0
  %868 = vmatprep.mubr.f32.mxu0 0.0
  %869 = vmatmul.mubr.f32.gmra.mxu0 %v750
  %v870 = vpop.f32.mrf.mxu0
  %v871 = vadd.f32 %v802, %v870
  %v872 = vpop.f32.mrf.mxu0
  %873 = vmatprep.mubr.f32.mxu0 0.0
  %874 = vmatmul.mubr.f32.gmra.mxu0 %v752
  %v875 = vpop.f32.mrf.mxu0
  %v876 = vadd.f32 %v802, %v875
  %v877 = vpop.f32.mrf.mxu0
  %878 = vmatprep.mubr.f32.mxu0 0.0
  %879 = vmatmul.mubr.f32.gmra.mxu0 %v754
  %v880 = vpop.f32.mrf.mxu0
  %v881 = vadd.f32 %v802, %v880
  %v882 = vpop.f32.mrf.mxu0
  %883 = vmatprep.mubr.f32.mxu0 0.0
  %884 = vmatmul.mubr.f32.gmra.mxu0 %v756
  %v885 = vpop.f32.mrf.mxu0
  %v886 = vadd.f32 %v802, %v885
  %v887 = vpop.f32.mrf.mxu0
  %888 = vmatprep.mubr.f32.mxu0 0.0
  %889 = vmatmul.mubr.f32.gmra.mxu0 %v758
  %v890 = vpop.f32.mrf.mxu0
  %v891 = vadd.f32 %v802, %v890
  %v892 = vpop.f32.mrf.mxu0
  %893 = vmatprep.mubr.f32.mxu0 0.0
  %894 = vmatmul.mubr.f32.gmra.mxu0 %v760
  %v895 = vpop.f32.mrf.mxu0
  %v896 = vadd.f32 %v802, %v895
  %v897 = vpop.f32.mrf.mxu0
  %898 = vmatprep.mubr.f32.mxu0 0.0
  %899 = vmatmul.mubr.f32.gmra.mxu0 %v762
  %v900 = vpop.f32.mrf.mxu0
  %v901 = vadd.f32 %v802, %v900
  %v902 = vpop.f32.mrf.mxu0
  %903 = vmatprep.mubr.f32.mxu0 0.0
  %904 = vmatmul.mubr.f32.gmra.mxu0 %v764
  %v905 = vpop.f32.mrf.mxu0
  %v906 = vadd.f32 %v802, %v905
  %v907 = vpop.f32.mrf.mxu0
  %908 = vmatprep.mubr.f32.mxu0 0.0
  %909 = vmatmul.mubr.f32.gmra.mxu0 %v766
  %v910 = vpop.f32.mrf.mxu0
  %v911 = vadd.f32 %v802, %v910
  %v912 = vpop.f32.mrf.mxu0
  %913 = vmatprep.mubr.f32.mxu0 0.0
  %914 = vmatmul.mubr.f32.gmra.mxu0 %v768
  %v915 = vpop.f32.mrf.mxu0
  %v916 = vadd.f32 %v802, %v915
  %v917 = vpop.f32.mrf.mxu0
  %918 = vmatprep.mubr.f32.mxu0 0.0
  %919 = vmatmul.mubr.f32.gmra.mxu0 %v770
  %v920 = vpop.f32.mrf.mxu0
  %v921 = vadd.f32 %v802, %v920
  %v922 = vpop.f32.mrf.mxu0
  %923 = vmatprep.mubr.f32.mxu0 0.0
  %924 = vmatmul.mubr.f32.gmra.mxu0 %v772
  %v925 = vpop.f32.mrf.mxu0
  %v926 = vadd.f32 %v802, %v925
  %v927 = vpop.f32.mrf.mxu0
  %928 = vmatprep.mubr.f32.mxu0 0.0
  %929 = vmatmul.mubr.f32.gmra.mxu0 %v774
  %v930 = vpop.f32.mrf.mxu0
  %v931 = vadd.f32 %v802, %v930
  %v932 = vpop.f32.mrf.mxu0
  %933 = vmatprep.mubr.f32.mxu0 0.0
  %934 = vmatmul.mubr.f32.gmra.mxu0 %v776
  %v935 = vpop.f32.mrf.mxu0
  %v936 = vadd.f32 %v802, %v935
  %v937 = vpop.f32.mrf.mxu0
  %938 = vmatprep.mubr.f32.mxu0 0.0
  %939 = vmatmul.mubr.f32.gmra.mxu0 %v778
  %v940 = vpop.f32.mrf.mxu0
  %v941 = vadd.f32 %v802, %v940
  %v942 = vpop.f32.mrf.mxu0
  %943 = vmatprep.mubr.f32.mxu0 0.0
  %944 = vmatmul.mubr.f32.gmra.mxu0 %v780
  %v945 = vpop.f32.mrf.mxu0
  %v946 = vadd.f32 %v802, %v945
  %v947 = vpop.f32.mrf.mxu0
  %948 = vdwg.mxu0
  %v949 = vxor.u32 %v871, 2147483648
  %v950 = vxor.u32 %v876, 2147483648
  %v951 = vxor.u32 %v881, 2147483648
  %v952 = vxor.u32 %v886, 2147483648
  %v953 = vxor.u32 %v891, 2147483648
  %v954 = vxor.u32 %v896, 2147483648
  %v955 = vxor.u32 %v901, 2147483648
  %v956 = vxor.u32 %v906, 2147483648
  %v957 = vxor.u32 %v911, 2147483648
  %v958 = vxor.u32 %v916, 2147483648
  %v959 = vxor.u32 %v921, 2147483648
  %v960 = vxor.u32 %v926, 2147483648
  %v961 = vxor.u32 %v931, 2147483648
  %v962 = vxor.u32 %v936, 2147483648
  %v963 = vxor.u32 %v941, 2147483648
  %v964 = vxor.u32 %v946, 2147483648
  %v965 = vmul.f32 %v949, 1.442695
  %v966 = vpow.pop %v965
  %v967 = vmul.f32 %v950, 1.442695
  %v968 = vpow.pop %v967
  %v969 = vmul.f32 %v951, 1.442695
  %v970 = vpow.pop %v969
  %v971 = vmul.f32 %v952, 1.442695
  %v972 = vpow.pop %v971
  %v973 = vmul.f32 %v953, 1.442695
  %v974 = vpow.pop %v973
  %v975 = vmul.f32 %v954, 1.442695
  %v976 = vpow.pop %v975
  %v977 = vmul.f32 %v955, 1.442695
  %v978 = vpow.pop %v977
  %v979 = vmul.f32 %v956, 1.442695
  %v980 = vpow.pop %v979
  %v981 = vmul.f32 %v957, 1.442695
  %v982 = vpow.pop %v981
  %v983 = vmul.f32 %v958, 1.442695
  %v984 = vpow.pop %v983
  %v985 = vmul.f32 %v959, 1.442695
  %v986 = vpow.pop %v985
  %v987 = vmul.f32 %v960, 1.442695
  %v988 = vpow.pop %v987
  %v989 = vmul.f32 %v961, 1.442695
  %v990 = vpow.pop %v989
  %v991 = vmul.f32 %v962, 1.442695
  %v992 = vpow.pop %v991
  %v993 = vmul.f32 %v963, 1.442695
  %v994 = vpow.pop %v993
  %v995 = vmul.f32 %v964, 1.442695
  %v996 = vpow.pop %v995
  %v997 = vadd.f32 %v966, 1.0
  %v998 = vadd.f32 %v968, 1.0
  %v999 = vadd.f32 %v970, 1.0
  %v1000 = vadd.f32 %v972, 1.0
  %v1001 = vadd.f32 %v974, 1.0
  %v1002 = vadd.f32 %v976, 1.0
  %v1003 = vadd.f32 %v978, 1.0
  %v1004 = vadd.f32 %v980, 1.0
  %v1005 = vadd.f32 %v982, 1.0
  %v1006 = vadd.f32 %v984, 1.0
  %v1007 = vadd.f32 %v986, 1.0
  %v1008 = vadd.f32 %v988, 1.0
  %v1009 = vadd.f32 %v990, 1.0
  %v1010 = vadd.f32 %v992, 1.0
  %v1011 = vadd.f32 %v994, 1.0
  %v1012 = vadd.f32 %v996, 1.0
  %v1013 = vrcp.pop %v997
  %v1014 = vmul.f32 1.0, %v1013
  %v1015 = vrcp.pop %v998
  %v1016 = vmul.f32 1.0, %v1015
  %v1017 = vrcp.pop %v999
  %v1018 = vmul.f32 1.0, %v1017
  %v1019 = vrcp.pop %v1000
  %v1020 = vmul.f32 1.0, %v1019
  %v1021 = vrcp.pop %v1001
  %v1022 = vmul.f32 1.0, %v1021
  %v1023 = vrcp.pop %v1002
  %v1024 = vmul.f32 1.0, %v1023
  %v1025 = vrcp.pop %v1003
  %v1026 = vmul.f32 1.0, %v1025
  %v1027 = vrcp.pop %v1004
  %v1028 = vmul.f32 1.0, %v1027
  %v1029 = vrcp.pop %v1005
  %v1030 = vmul.f32 1.0, %v1029
  %v1031 = vrcp.pop %v1006
  %v1032 = vmul.f32 1.0, %v1031
  %v1033 = vrcp.pop %v1007
  %v1034 = vmul.f32 1.0, %v1033
  %v1035 = vrcp.pop %v1008
  %v1036 = vmul.f32 1.0, %v1035
  %v1037 = vrcp.pop %v1009
  %v1038 = vmul.f32 1.0, %v1037
  %v1039 = vrcp.pop %v1010
  %v1040 = vmul.f32 1.0, %v1039
  %v1041 = vrcp.pop %v1011
  %v1042 = vmul.f32 1.0, %v1041
  %v1043 = vrcp.pop %v1012
  %v1044 = vmul.f32 1.0, %v1043
  %v1045 = vld [vmem:[%s8] sm:$0x1]
  %v1046 = vld [vmem:[#allocation2] sm:$0x1]
  %1048 = vset.pattern.permute.xlu0 0
  %1049 = vperm.xlu0 %1048, %v1046
  %v1050 = vpop.permute.xlu0 %1049
  %v1052 = vlaneseq
  %v1053 = vshrl.u32 %v1052, 7
  %v1054 = vsub.s32 0, %v1053
  %v1055 = vrot.slane %v1050, %v1054
  %1056 = vmatprep.subr.mxu0 0.0
  %1057 = vmatpush1.xpose.msra.mxu0 %v1044
  %1058 = vmatprep.subr.mxu0 0.0
  %1059 = vmatpush1.xpose.msra.mxu0 %v1042
  %1060 = vmatprep.subr.mxu0 0.0
  %1061 = vmatpush1.xpose.msra.mxu0 %v1040
  %1062 = vmatprep.subr.mxu0 0.0
  %1063 = vmatpush1.xpose.msra.mxu0 %v1038
  %1064 = vmatprep.subr.mxu0 0.0
  %1065 = vmatpush1.xpose.msra.mxu0 %v1036
  %1066 = vmatprep.subr.mxu0 0.0
  %1067 = vmatpush1.xpose.msra.mxu0 %v1034
  %1068 = vmatprep.subr.mxu0 0.0
  %1069 = vmatpush1.xpose.msra.mxu0 %v1032
  %1070 = vmatprep.subr.mxu0 0.0
  %1071 = vmatpush1.xpose.msra.mxu0 %v1030
  %1072 = vmatprep.subr.mxu0 0.0
  %1073 = vmatpush1.xpose.msra.mxu0 %v1028
  %1074 = vmatprep.subr.mxu0 0.0
  %1075 = vmatpush1.xpose.msra.mxu0 %v1026
  %1076 = vmatprep.subr.mxu0 0.0
  %1077 = vmatpush1.xpose.msra.mxu0 %v1024
  %1078 = vmatprep.subr.mxu0 0.0
  %1079 = vmatpush1.xpose.msra.mxu0 %v1022
  %1080 = vmatprep.subr.mxu0 0.0
  %1081 = vmatpush1.xpose.msra.mxu0 %v1020
  %1082 = vmatprep.subr.mxu0 0.0
  %1083 = vmatpush1.xpose.msra.mxu0 %v1018
  %1084 = vmatprep.subr.mxu0 0.0
  %1085 = vmatpush1.xpose.msra.mxu0 %v1016
  %1086 = vmatprep.subr.mxu0 0.0
  %1087 = vmatpush1.xpose.msra.mxu0 %v1014
  %1088 = vmatprep.subr.mxu0 0.0
  %1089 = vmatpush2.xpose.msra.mxu0 0.0
  %1090 = vmatprep.subr.mxu0 0.0
  %1091 = vmatpush2.xpose.msra.mxu0 0.0
  %1092 = vmatprep.subr.mxu0 0.0
  %1093 = vmatpush2.xpose.msra.mxu0 0.0
  %1094 = vmatprep.subr.mxu0 0.0
  %1095 = vmatpush2.xpose.msra.mxu0 0.0
  %1096 = vmatprep.subr.mxu0 0.0
  %1097 = vmatpush2.xpose.msra.mxu0 0.0
  %1098 = vmatprep.subr.mxu0 0.0
  %1099 = vmatpush2.xpose.msra.mxu0 0.0
  %1100 = vmatprep.subr.mxu0 0.0
  %1101 = vmatpush2.xpose.msra.mxu0 0.0
  %1102 = vmatprep.subr.mxu0 0.0
  %1103 = vmatpush2.xpose.msra.mxu0 0.0
  %1104 = vmatprep.subr.mxu0 0.0
  %1105 = vmatpush2.xpose.msra.mxu0 0.0
  %1106 = vmatprep.subr.mxu0 0.0
  %1107 = vmatpush2.xpose.msra.mxu0 0.0
  %1108 = vmatprep.subr.mxu0 0.0
  %1109 = vmatpush2.xpose.msra.mxu0 0.0
  %1110 = vmatprep.subr.mxu0 0.0
  %1111 = vmatpush2.xpose.msra.mxu0 0.0
  %1112 = vmatprep.subr.mxu0 0.0
  %1113 = vmatpush2.xpose.msra.mxu0 0.0
  %1114 = vmatprep.subr.mxu0 0.0
  %1115 = vmatpush2.xpose.msra.mxu0 0.0
  %1116 = vmatprep.subr.mxu0 0.0
  %1117 = vmatpush2.xpose.msra.mxu0 0.0
  %1118 = vmatprep.subr.mxu0 0.0
  %1119 = vmatpush2.xpose.msra.mxu0 0.0
  %1120 = vmatprep.mubr.f32.mxu0 0.0
  %1121 = vmatmul.mubr.f32.gmra.mxu0 %v1045
  %v1122 = vpop.f32.mrf.mxu0
  %v1123 = vadd.f32 %v1055, %v1122
  %v1124 = vpop.f32.mrf.mxu0
  %1125 = vdwg.mxu0
  %v1126 = vxor.u32 %v1123, 2147483648
  %v1127 = vmul.f32 %v1126, 1.442695
  %v1128 = vpow.pop %v1127
  %v1129 = vadd.f32 %v1128, 1.0
  %v1130 = vrcp.pop %v1129
  %v1131 = vmul.f32 1.0, %v1130
  %1132 = vst [vmem:[%s10] sm:$0x1] %v1131
  // Predicated region
  $region42: #{ncdm_forward.1} parent=0 // pred_check
    _
  $region43: #{ncdm_forward.1} parent=0 // pred_check_branch
    %1134 = sbr.rel (0) target = $region45
  $region44: #{ncdm_forward.1} parent=0 // pred_region
    _
  $region45: #{ncdm_forward.1} parent=0 // pred_fallthru
    _
  // Predicated region
  $region46: #{ncdm_forward.1} parent=0 // pred_check
    _
  $region47: #{ncdm_forward.1} parent=0 // pred_check_branch
    %1136 = sbr.rel (0) target = $region49
  $region48: #{ncdm_forward.1} parent=0 // pred_region
    _
  $region49: #{ncdm_forward.1} parent=0 // pred_fallthru
    _

</llo_original>
